<compile_context>
chip_gen: v5e
topology: v5e:2x2
jax: 0.10.0
libtpu: 0.0.40
codegen_flags: <defaults>
</compile_context>

<pallas_src>
import jax
import jax.numpy as jnp
from jax.experimental import pallas as pl
from jax.experimental.pallas import tpu as pltpu


def _pooler_kernel(x_ref, w_ref, b_ref, o_ref):
    # x_ref : (tile_m, H)       first-token activation rows
    # w_ref : (H, tile_n)       weight column slab, [in, out] layout
    # b_ref : (1, tile_n)       bias slab, kept f32 end-to-end
    # o_ref : (tile_m, tile_n)
    x = x_ref[...]
    if x.dtype != w_ref.dtype:
        # VPU cast (e.g. f32 activations -> bf16) so the MXU runs its native
        # bf16 path while the weight stream stays at half the HBM bytes.
        x = x.astype(w_ref.dtype)
    h = jnp.dot(x, w_ref[...], preferred_element_type=jnp.float32)  # MXU, f32 acc
    h = h + b_ref[...]                                              # f32 bias add
    o_ref[...] = jnp.tanh(h).astype(o_ref.dtype)                    # EUP tanh, cast on store


def _round_up(x, m):
    return ((x + m - 1) // m) * m


def prepare_pooler_params(weight, bias, *, matmul_dtype=None):
    """One-time (weight-load-time) parameter prep.

    weight : [out, in]  (PyTorch nn.Linear layout) -> returned as [in, out].
    matmul_dtype : dtype fed to the MXU (e.g. jnp.bfloat16 halves HBM weight
        bytes for f32 models at bf16-level accuracy).  None keeps the dtype.
    Doing the HxH transpose/cast here (outside the per-call path) means it is
    never re-read from / re-written to HBM on every forward call.
    """
    w_t = weight.T
    if matmul_dtype is not None:
        w_t = w_t.astype(matmul_dtype)
    b = bias.astype(jnp.float32).reshape(1, -1)
    return w_t, b


def _pick_tile_n(h_in, h_out, w_itemsize, weight_buf_bytes, min_col_steps):
    """Column-slab width: VMEM-budgeted, overlap-friendly, exact divisor of h_out."""
    if h_out % 128 != 0:
        return h_out  # lane dim must be a multiple of 128 or the full extent
    by_budget = max(128, (weight_buf_bytes // (h_in * w_itemsize)) // 128 * 128)
    by_overlap = max(512, _round_up(pl.cdiv(h_out, min_col_steps), 128))
    target = max(128, min(h_out, by_budget, by_overlap))
    d = target
    while d > 128 and h_out % d != 0:
        d -= 128
    return d


def tf_pooler(hidden_states, weight_t, bias, *, tile_m=256, tile_n=None,
              weight_buf_bytes=8 << 20, min_col_steps=8,
              single_buffer_constants=True, vmem_limit_bytes=None):
    """Fused BERT pooler: tanh(hidden_states[:, 0] @ weight_t + bias).

    hidden_states: [B, S, H]
    weight_t     : [H, H_out] -- ALREADY transposed to [in, out] (and optionally
                   cast, e.g. bf16) via prepare_pooler_params().
    bias         : [H_out] (or [1, H_out]); kept in f32 inside the kernel.
    """
    B, S, H = hidden_states.shape
    H_in, H_out = weight_t.shape
    assert H_in == H, f"weight_t must be [in={H}, out], got {weight_t.shape}"
    dtype = hidden_states.dtype

    # First-token selection (cheap XLA slice; kernel only sees dense (tile_m, H) slabs).
    x = hidden_states[:, 0, :]
    b2 = bias.astype(jnp.float32).reshape(1, H_out)

    # ---- tile sizing -------------------------------------------------------
    itemsize = jnp.dtype(dtype).itemsize
    w_itemsize = jnp.dtype(weight_t.dtype).itemsize
    row_align = 8 * max(1, 4 // itemsize)              # 8 rows (f32) / 16 rows (bf16)

    tile_m = min(tile_m, _round_up(B, row_align))
    tile_m = max(row_align, _round_up(tile_m, row_align))
    M = _round_up(B, tile_m)
    if M != B:
        x = jnp.pad(x, ((0, M - B), (0, 0)))           # padded rows sliced off below

    if tile_n is None:
        tile_n = _pick_tile_n(H_in, H_out, w_itemsize, weight_buf_bytes, min_col_steps)
    assert H_out % tile_n == 0, (H_out, tile_n)

    grid_m, grid_n = M // tile_m, H_out // tile_n
    grid = (grid_m, grid_n)

    # ---- VMEM budget from the actual working set ----------------------------
    const_cols = grid_n == 1                 # weight/bias index_map constant over grid
    use_single = const_cols and single_buffer_constants
    w_bufs = 1 if use_single else 2
    need = (H_in * tile_n * w_itemsize * w_bufs        # weight slab buffer(s)
            + tile_n * 4 * w_bufs                      # bias slab buffer(s)
            + 2 * tile_m * H_in * itemsize             # x tile, double buffered
            + 2 * tile_m * tile_n * itemsize)          # out tile, double buffered
    if vmem_limit_bytes is None:
        vmem_limit_bytes = int(min(max(need + need // 4 + (2 << 20), 32 << 20),
                                   128 << 20))

    out_shape = jax.ShapeDtypeStruct((M, H_out), dtype)
    x_spec = pl.BlockSpec((tile_m, H_in), lambda i, j: (i, 0))      # resident across j
    out_spec = pl.BlockSpec((tile_m, tile_n), lambda i, j: (i, j))  # lane-dense writes

    def build(single_buffer):
        cb = {"pipeline_mode": pl.Buffered(1)} if single_buffer else {}
        in_specs = [
            x_spec,
            pl.BlockSpec((H_in, tile_n), lambda i, j: (0, j), **cb),  # weight column slab
            pl.BlockSpec((1, tile_n), lambda i, j: (0, j), **cb),     # bias slab (f32)
        ]
        return pl.pallas_call(
            _pooler_kernel,
            out_shape=out_shape,
            grid=grid,
            in_specs=in_specs,
            out_specs=out_spec,
            compiler_params=pltpu.CompilerParams(
                # Rows and output columns are fully independent -> both parallel,
                # so v7x's two TensorCores split weight traffic and MXU work.
                dimension_semantics=("parallel", "parallel"),
                vmem_limit_bytes=vmem_limit_bytes,
            ),
        )

    if use_single:
        try:
            out = build(True)(x, weight_t, b2)
        except Exception:  # graceful fallback if Buffered(1) is unsupported here
            out = build(False)(x, weight_t, b2)
    else:
        out = build(False)(x, weight_t, b2)

    return out if M == B else out[:B]


def _reference(hidden_states, weight, bias):
    first = hidden_states[:, 0, :]
    return jnp.tanh(jnp.einsum("bh,oh->bo", first, weight) + bias)


if __name__ == "__main__":
    B, S, H = 2, 8, 32   # batch=2, seq=8, hidden=32

    key = jax.random.PRNGKey(0)
    k1, k2, k3 = jax.random.split(key, 3)

    hidden_states = jax.random.normal(k1, (B, S, H), dtype=jnp.float32)

    # Deterministic parameter init (synthetic, PyTorch nn.Linear-like scale).
    bound = 1.0 / (H ** 0.5)
    weight = jax.random.uniform(k2, (H, H), minval=-bound, maxval=bound, dtype=jnp.float32)
    bias = jax.random.uniform(k3, (H,), minval=-bound, maxval=bound, dtype=jnp.float32)

    ref = _reference(hidden_states, weight, bias)

    # Full-precision path: weight kept f32, matches the f32 reference tightly.
    w_t, b2 = prepare_pooler_params(weight, bias)
    out = jax.block_until_ready(tf_pooler(hidden_states, w_t, b2))
    assert out.shape == (B, H), f"bad shape {out.shape}"
    assert jnp.allclose(out, ref, atol=1e-4, rtol=1e-4), "mismatch vs reference (f32)"

    # Bandwidth-optimized path: bf16 weight stream, f32 MXU accumulation.
    w_bf16, b2 = prepare_pooler_params(weight, bias, matmul_dtype=jnp.bfloat16)
    out_bf16 = jax.block_until_ready(tf_pooler(hidden_states, w_bf16, b2))
    assert out_bf16.shape == (B, H), f"bad shape {out_bf16.shape}"
    assert jnp.allclose(out_bf16, ref, atol=2e-2, rtol=2e-2), "mismatch vs reference (bf16)"

    print("KERNEL_OK")
</pallas_src>

<mosaic_0001>
module attributes {stable_mosaic.version = 11 : i64} {
  func.func @_pooler_kernel(%arg0: i32, %arg1: i32, %arg2: memref<8x32xf32, #tpu.memory_space<vmem>>, %arg3: memref<32x32xf32, #tpu.memory_space<vmem>>, %arg4: memref<1x32xf32, #tpu.memory_space<vmem>>, %arg5: memref<8x32xf32, #tpu.memory_space<vmem>>) attributes {dimension_semantics = [#tpu.dimension_semantics<parallel>, #tpu.dimension_semantics<parallel>], iteration_bounds = array<i64: 1, 1>, scalar_prefetch = 0 : i64, scratch_operands = 0 : i64, tpu.core_type = #tpu.core_type<tc>, window_params = [{transform_indices = @transform_0, window_bounds = array<i64: 8, 32>}, {pipeline_mode = #tpu.pipeline_mode<synchronous>, transform_indices = @transform_1, window_bounds = array<i64: 32, 32>}, {pipeline_mode = #tpu.pipeline_mode<synchronous>, transform_indices = @transform_2, window_bounds = array<i64: 1, 32>}, {transform_indices = @transform_3, window_bounds = array<i64: 8, 32>}]} {
    %c0 = arith.constant 0 : index
    %c0_0 = arith.constant 0 : index
    %0 = vector.load %arg2[%c0, %c0_0] : memref<8x32xf32, #tpu.memory_space<vmem>>, vector<8x32xf32>
    %c0_1 = arith.constant 0 : index
    %c0_2 = arith.constant 0 : index
    %1 = vector.load %arg3[%c0_1, %c0_2] : memref<32x32xf32, #tpu.memory_space<vmem>>, vector<32x32xf32>
    %cst = arith.constant dense<0.000000e+00> : vector<8x32xf32>
    %2 = tpu.matmul %0, %1, %cst {dimension_numbers = #tpu.dot_dimension_numbers<[1], [0], [0], [1], [0, 0, 1, 1], [], []>} : vector<8x32xf32>, vector<32x32xf32>, vector<8x32xf32> -> vector<8x32xf32>
    %c0_3 = arith.constant 0 : index
    %c0_4 = arith.constant 0 : index
    %3 = vector.load %arg4[%c0_3, %c0_4] : memref<1x32xf32, #tpu.memory_space<vmem>>, vector<1x32xf32>
    %4 = vector.broadcast %3 : vector<1x32xf32> to vector<8x32xf32>
    %5 = arith.addf %2, %4 : vector<8x32xf32>
    %6 = math.tanh %5 : vector<8x32xf32>
    %c0_5 = arith.constant 0 : index
    %c0_6 = arith.constant 0 : index
    %7 = vector.load %arg5[%c0_5, %c0_6] : memref<8x32xf32, #tpu.memory_space<vmem>>, vector<8x32xf32>
    tpu.vector_store %arg5[%c0_5, %c0_6], %6 {strides = array<i32>} : memref<8x32xf32, #tpu.memory_space<vmem>>, vector<8x32xf32>,
    return
  }
  func.func @transform_0(%arg0: i32, %arg1: i32) -> (i32, i32) {
    %c0_i32 = arith.constant 0 : i32
    %c0_i32_0 = arith.constant 0 : i32
    return %arg0, %c0_i32 : i32, i32
  }
  func.func @transform_1(%arg0: i32, %arg1: i32) -> (i32, i32) {
    %c0_i32 = arith.constant 0 : i32
    %c0_i32_0 = arith.constant 0 : i32
    return %c0_i32, %arg1 : i32, i32
  }
  func.func @transform_2(%arg0: i32, %arg1: i32) -> (i32, i32) {
    %c0_i32 = arith.constant 0 : i32
    %c0_i32_0 = arith.constant 0 : i32
    return %c0_i32, %arg1 : i32, i32
  }
  func.func @transform_3(%arg0: i32, %arg1: i32) -> (i32, i32) {
    %c0_i32 = arith.constant 0 : i32
    return %arg0, %arg1 : i32, i32
  }
}

module attributes {stable_mosaic.version = 11 : i64} {
  func.func @_pooler_kernel(%arg0: i32, %arg1: i32, %arg2: memref<8x32xf32, #tpu.memory_space<vmem>>, %arg3: memref<32x32xf32, #tpu.memory_space<vmem>>, %arg4: memref<1x32xf32, #tpu.memory_space<vmem>>, %arg5: memref<8x32xf32, #tpu.memory_space<vmem>>) attributes {dimension_semantics = [#tpu.dimension_semantics<parallel>, #tpu.dimension_semantics<parallel>], iteration_bounds = array<i64: 1, 1>, scalar_prefetch = 0 : i64, scratch_operands = 0 : i64, tpu.core_type = #tpu.core_type<tc>, window_params = [{transform_indices = @transform_0, window_bounds = array<i64: 8, 32>}, {transform_indices = @transform_1, window_bounds = array<i64: 32, 32>}, {transform_indices = @transform_2, window_bounds = array<i64: 1, 32>}, {transform_indices = @transform_3, window_bounds = array<i64: 8, 32>}]} {
    %c0 = arith.constant 0 : index
    %c0_0 = arith.constant 0 : index
    %0 = vector.load %arg2[%c0, %c0_0] : memref<8x32xf32, #tpu.memory_space<vmem>>, vector<8x32xf32>
    %c0_1 = arith.constant 0 : index
    %c0_2 = arith.constant 0 : index
    %1 = vector.load %arg3[%c0_1, %c0_2] : memref<32x32xf32, #tpu.memory_space<vmem>>, vector<32x32xf32>
    %cst = arith.constant dense<0.000000e+00> : vector<8x32xf32>
    %2 = tpu.matmul %0, %1, %cst {dimension_numbers = #tpu.dot_dimension_numbers<[1], [0], [0], [1], [0, 0, 1, 1], [], []>} : vector<8x32xf32>, vector<32x32xf32>, vector<8x32xf32> -> vector<8x32xf32>
    %c0_3 = arith.constant 0 : index
    %c0_4 = arith.constant 0 : index
    %3 = vector.load %arg4[%c0_3, %c0_4] : memref<1x32xf32, #tpu.memory_space<vmem>>, vector<1x32xf32>
    %4 = vector.broadcast %3 : vector<1x32xf32> to vector<8x32xf32>
    %5 = arith.addf %2, %4 : vector<8x32xf32>
    %6 = math.tanh %5 : vector<8x32xf32>
    %c0_5 = arith.constant 0 : index
    %c0_6 = arith.constant 0 : index
    %7 = vector.load %arg5[%c0_5, %c0_6] : memref<8x32xf32, #tpu.memory_space<vmem>>, vector<8x32xf32>
    tpu.vector_store %arg5[%c0_5, %c0_6], %6 {strides = array<i32>} : memref<8x32xf32, #tpu.memory_space<vmem>>, vector<8x32xf32>,
    return
  }
  func.func @transform_0(%arg0: i32, %arg1: i32) -> (i32, i32) {
    %c0_i32 = arith.constant 0 : i32
    %c0_i32_0 = arith.constant 0 : i32
    return %arg0, %c0_i32 : i32, i32
  }
  func.func @transform_1(%arg0: i32, %arg1: i32) -> (i32, i32) {
    %c0_i32 = arith.constant 0 : i32
    %c0_i32_0 = arith.constant 0 : i32
    return %c0_i32, %arg1 : i32, i32
  }
  func.func @transform_2(%arg0: i32, %arg1: i32) -> (i32, i32) {
    %c0_i32 = arith.constant 0 : i32
    %c0_i32_0 = arith.constant 0 : i32
    return %c0_i32, %arg1 : i32, i32
  }
  func.func @transform_3(%arg0: i32, %arg1: i32) -> (i32, i32) {
    %c0_i32 = arith.constant 0 : i32
    return %arg0, %arg1 : i32, i32
  }
}

</mosaic_0001>

<llo_original>
// kernel: tpu_custom_call.1
$region0: #{tpu_custom_call.1}
  #allocation0 [shape = 'u32[]', space=smem, size = 0x4, offset = 0x4, fixed_abs, tag = 'smem constant byte address 0x4 - core index']
  #allocation1 [shape = 'u32[72,128]{1,0:T(1,128)}', space=vmem, size = 0x9000, scoped, tag = 'internal scratch']
  %s0 = inlined_call_operand.hbm [shape: f32[8,32], index: 0, kind: input, shape index: {}]
  %s1 = inlined_call_operand.hbm [shape: f32[32,32], index: 1, kind: input, shape index: {}]
  %s2 = inlined_call_operand.vmem [shape: f32[1,32], index: 2, kind: input, shape index: {}]
  %s3 = inlined_call_operand.hbm [shape: f32[8,32], index: 3, kind: output, shape index: {}]
  %s4 = sld [smem:[#allocation0]]
  $region30: #{tpu_custom_call.1} parent=0
    _
  %s6 = ssub.s32 1, %s4
  %s7 = scalar_select 0, %s6, %s4
  $region1: #{tpu_custom_call.1} parent=0
    #allocation2 [shape = 'u8[4096]{0}', space=vmem, size = 0x1000, scoped, tag = 'input window, operand 0, single buffered']
    #allocation3 [shape = 's32[1]{0}', space=sflag, size = 0x4, scoped, tag = 'scoped memory for tpu_custom_call.1']
    #allocation4 [shape = 's32[1]{0}', space=sflag, size = 0x4, scoped, tag = 'scoped memory for tpu_custom_call.1']
    #allocation5 [shape = 'u8[16384]{0}', space=vmem, size = 0x4000, scoped, tag = 'input window, operand 1, single buffered']
    #allocation6 [shape = 's32[1]{0}', space=sflag, size = 0x4, scoped, tag = 'scoped memory for tpu_custom_call.1']
    #allocation7 [shape = 'u8[4096]{0}', space=vmem, size = 0x1000, scoped, tag = 'output window, operand 0, single buffered']
    %8 = vsyncpa [#allocation3], 0
    %9 = vsyncpa [#allocation6], 0
    %10 = vsyncpa [#allocation4], 0
    // Predicated region
    $region2: #{tpu_custom_call.1} parent=1 // pred_check
      _
    $region3: #{tpu_custom_call.1} parent=1 // pred_check_branch
      %12 = sbr.rel (0) target = $region5
    $region4: #{tpu_custom_call.1} parent=1 // pred_region
      %14 = vsyncadd [#allocation3], 0
      %s16 = sshll.u32 %s0, 4
      %s17 = int_to_ptr.hbm [resolvable:$true] %s16
      %s18 = sshll.u32 [#allocation2], 4
      %s19 = int_to_ptr.vmem [resolvable:$true] %s18
      %21 = dma.hbm_to_vmem [thread:$0]  %s17, 128, %s19, [#allocation3]
    $region5: #{tpu_custom_call.1} parent=1 // pred_fallthru
      _
    // Predicated region
    $region6: #{tpu_custom_call.1} parent=1 // pred_check
      _
    $region7: #{tpu_custom_call.1} parent=1 // pred_check_branch
      %23 = sbr.rel (0) target = $region9
    $region8: #{tpu_custom_call.1} parent=1 // pred_region
      %25 = vsyncadd [#allocation6], 0
      %s26 = sshll.u32 %s1, 4
      %s27 = int_to_ptr.hbm [resolvable:$true] %s26
      %s28 = sshll.u32 [#allocation5], 4
      %s29 = int_to_ptr.vmem [resolvable:$true] %s28
      %34 = dma.hbm_to_vmem [thread:$0]  %s27, 512, %s29, [#allocation6], 128, 128, 8
    $region9: #{tpu_custom_call.1} parent=1 // pred_fallthru
      _
    // Predicated region
    $region10: #{tpu_custom_call.1} parent=1 // pred_check
      _
    $region11: #{tpu_custom_call.1} parent=1 // pred_check_branch
      %36 = sbr.rel (0) target = $region13
    $region12: #{tpu_custom_call.1} parent=1 // pred_region
      _
    $region13: #{tpu_custom_call.1} parent=1 // pred_fallthru
      _
    // Predicated region
    $region14: #{tpu_custom_call.1} parent=1 // pred_check
      _
    $region15: #{tpu_custom_call.1} parent=1 // pred_check_branch
      %38 = sbr.rel (0) target = $region17
    $region16: #{tpu_custom_call.1} parent=1 // pred_region
      %40 = dma.done [#allocation3], 128
    $region17: #{tpu_custom_call.1} parent=1 // pred_fallthru
      _
    // Predicated region
    $region18: #{tpu_custom_call.1} parent=1 // pred_check
      _
    $region19: #{tpu_custom_call.1} parent=1 // pred_check_branch
      %42 = sbr.rel (0) target = $region21
    $region20: #{tpu_custom_call.1} parent=1 // pred_region
      %44 = dma.done [#allocation6], 512
    $region21: #{tpu_custom_call.1} parent=1 // pred_fallthru
      _
    %v45 = vld [vmem:[#allocation2] sm:$0xff]
    %v46 = vld [vmem:[#allocation5] sm:$0xff]
    %v47 = vld [vmem:[#allocation5 + $0x8] sm:$0xff]
    %v48 = vld [vmem:[#allocation5 + $0x10] sm:$0xff]
    %v49 = vld [vmem:[#allocation5 + $0x18] sm:$0xff]
    %v50 = vld [vmem:[%s2] sm:$0x1]
    %v52 = vperm.slane %v50, 0
    %vm54 = vcmask 261120
    %v56 = vsel %vm54, %v45, 0
    %58 = vmatpush.msra.mxu0 0.0
    %59 = vmatpush.msra.mxu0 0.0
    %60 = vmatpush.msra.mxu0 0.0
    %61 = vmatpush.msra.mxu0 0.0
    %62 = vmatpush.msra.mxu0 0.0
    %63 = vmatpush.msra.mxu0 0.0
    %64 = vmatpush.msra.mxu0 0.0
    %65 = vmatpush.msra.mxu0 0.0
    %66 = vmatpush.msra.mxu0 0.0
    %67 = vmatpush.msra.mxu0 0.0
    %68 = vmatpush.msra.mxu0 0.0
    %69 = vmatpush.msra.mxu0 0.0
    %70 = vmatpush.msra.mxu0 %v49
    %71 = vmatpush.msra.mxu0 %v48
    %72 = vmatpush.msra.mxu0 %v47
    %73 = vmatpush.msra.mxu0 %v46
    %74 = vmatmul.f32.gmra.mxu0 %v56
    %v75 = vpop.f32.mrf.mxu0
    %v76 = vadd.f32 %v52, %v75
    %77 = vdwg.mxu0
    %v78 = vtanh.pop %v76
    %79 = vst.msk [vmem:[#allocation7] sm:$0xff] %vm54, %v78
    // Predicated region
    $region22: #{tpu_custom_call.1} parent=1 // pred_check
      _
    $region23: #{tpu_custom_call.1} parent=1 // pred_check_branch
      %81 = sbr.rel (0) target = $region25
    $region24: #{tpu_custom_call.1} parent=1 // pred_region
      %83 = vsyncadd [#allocation4], 0
      %s85 = sshll.u32 [#allocation7], 4
      %s86 = int_to_ptr.vmem [resolvable:$true] %s85
      %s87 = sshll.u32 %s3, 4
      %s88 = int_to_ptr.hbm [resolvable:$true] %s87
      %90 = dma.vmem_to_hbm [thread:$0]  %s86, 128, %s88, [#allocation4]
    $region25: #{tpu_custom_call.1} parent=1 // pred_fallthru
      _
    // Predicated region
    $region26: #{tpu_custom_call.1} parent=1 // pred_check
      _
    $region27: #{tpu_custom_call.1} parent=1 // pred_check_branch
      %92 = sbr.rel (0) target = $region29
    $region28: #{tpu_custom_call.1} parent=1 // pred_region
      %94 = dma.done [#allocation4], 128
    $region29: #{tpu_custom_call.1} parent=1 // pred_fallthru
      _
    %95 = vsyncpa [#allocation3], 1
    %96 = vsyncpa [#allocation6], 1
    %97 = vsyncpa [#allocation4], 1

// kernel: tpu_custom_call.1
$region0: #{tpu_custom_call.1}
  #allocation0 [shape = 'u32[]', space=smem, size = 0x4, offset = 0x4, fixed_abs, tag = 'smem constant byte address 0x4 - core index']
  #allocation1 [shape = 'u32[72,128]{1,0:T(1,128)}', space=vmem, size = 0x9000, scoped, tag = 'internal scratch']
  %s0 = inlined_call_operand.hbm [shape: f32[8,32], index: 0, kind: input, shape index: {}]
  %s1 = inlined_call_operand.hbm [shape: f32[32,32], index: 1, kind: input, shape index: {}]
  %s2 = inlined_call_operand.vmem [shape: f32[1,32], index: 2, kind: input, shape index: {}]
  %s3 = inlined_call_operand.hbm [shape: f32[8,32], index: 3, kind: output, shape index: {}]
  %s4 = sld [smem:[#allocation0]]
  $region30: #{tpu_custom_call.1} parent=0
    _
  %s6 = ssub.s32 1, %s4
  %s7 = scalar_select 0, %s6, %s4
  $region1: #{tpu_custom_call.1} parent=0
    #allocation2 [shape = 'u8[4096]{0}', space=vmem, size = 0x1000, scoped, tag = 'input window, operand 0, single buffered']
    #allocation3 [shape = 's32[1]{0}', space=sflag, size = 0x4, scoped, tag = 'scoped memory for tpu_custom_call.1']
    #allocation4 [shape = 's32[1]{0}', space=sflag, size = 0x4, scoped, tag = 'scoped memory for tpu_custom_call.1']
    #allocation5 [shape = 'u8[16384]{0}', space=vmem, size = 0x4000, scoped, tag = 'input window, operand 1, single buffered']
    #allocation6 [shape = 's32[1]{0}', space=sflag, size = 0x4, scoped, tag = 'scoped memory for tpu_custom_call.1']
    #allocation7 [shape = 'u8[4096]{0}', space=vmem, size = 0x1000, scoped, tag = 'output window, operand 0, single buffered']
    %8 = vsyncpa [#allocation3], 0
    %9 = vsyncpa [#allocation6], 0
    %10 = vsyncpa [#allocation4], 0
    // Predicated region
    $region2: #{tpu_custom_call.1} parent=1 // pred_check
      _
    $region3: #{tpu_custom_call.1} parent=1 // pred_check_branch
      %12 = sbr.rel (0) target = $region5
    $region4: #{tpu_custom_call.1} parent=1 // pred_region
      %14 = vsyncadd [#allocation3], 0
      %s16 = sshll.u32 %s0, 4
      %s17 = int_to_ptr.hbm [resolvable:$true] %s16
      %s18 = sshll.u32 [#allocation2], 4
      %s19 = int_to_ptr.vmem [resolvable:$true] %s18
      %21 = dma.hbm_to_vmem [thread:$0]  %s17, 128, %s19, [#allocation3]
    $region5: #{tpu_custom_call.1} parent=1 // pred_fallthru
      _
    // Predicated region
    $region6: #{tpu_custom_call.1} parent=1 // pred_check
      _
    $region7: #{tpu_custom_call.1} parent=1 // pred_check_branch
      %23 = sbr.rel (0) target = $region9
    $region8: #{tpu_custom_call.1} parent=1 // pred_region
      %25 = vsyncadd [#allocation6], 0
      %s26 = sshll.u32 %s1, 4
      %s27 = int_to_ptr.hbm [resolvable:$true] %s26
      %s28 = sshll.u32 [#allocation5], 4
      %s29 = int_to_ptr.vmem [resolvable:$true] %s28
      %34 = dma.hbm_to_vmem [thread:$0]  %s27, 512, %s29, [#allocation6], 128, 128, 8
    $region9: #{tpu_custom_call.1} parent=1 // pred_fallthru
      _
    // Predicated region
    $region10: #{tpu_custom_call.1} parent=1 // pred_check
      _
    $region11: #{tpu_custom_call.1} parent=1 // pred_check_branch
      %36 = sbr.rel (0) target = $region13
    $region12: #{tpu_custom_call.1} parent=1 // pred_region
      _
    $region13: #{tpu_custom_call.1} parent=1 // pred_fallthru
      _
    // Predicated region
    $region14: #{tpu_custom_call.1} parent=1 // pred_check
      _
    $region15: #{tpu_custom_call.1} parent=1 // pred_check_branch
      %38 = sbr.rel (0) target = $region17
    $region16: #{tpu_custom_call.1} parent=1 // pred_region
      %40 = dma.done [#allocation3], 128
    $region17: #{tpu_custom_call.1} parent=1 // pred_fallthru
      _
    // Predicated region
    $region18: #{tpu_custom_call.1} parent=1 // pred_check
      _
    $region19: #{tpu_custom_call.1} parent=1 // pred_check_branch
      %42 = sbr.rel (0) target = $region21
    $region20: #{tpu_custom_call.1} parent=1 // pred_region
      %44 = dma.done [#allocation6], 512
    $region21: #{tpu_custom_call.1} parent=1 // pred_fallthru
      _
    %v45 = vld [vmem:[#allocation2] sm:$0xff]
    %v46 = vld [vmem:[#allocation5] sm:$0xff]
    %v47 = vld [vmem:[#allocation5 + $0x8] sm:$0xff]
    %v48 = vld [vmem:[#allocation5 + $0x10] sm:$0xff]
    %v49 = vld [vmem:[#allocation5 + $0x18] sm:$0xff]
    %v50 = vld [vmem:[%s2] sm:$0x1]
    %v52 = vperm.slane %v50, 0
    %vm54 = vcmask 261120
    %v56 = vsel %vm54, %v45, 0
    %58 = vmatpush.msra.mxu0 0.0
    %59 = vmatpush.msra.mxu0 0.0
    %60 = vmatpush.msra.mxu0 0.0
    %61 = vmatpush.msra.mxu0 0.0
    %62 = vmatpush.msra.mxu0 0.0
    %63 = vmatpush.msra.mxu0 0.0
    %64 = vmatpush.msra.mxu0 0.0
    %65 = vmatpush.msra.mxu0 0.0
    %66 = vmatpush.msra.mxu0 0.0
    %67 = vmatpush.msra.mxu0 0.0
    %68 = vmatpush.msra.mxu0 0.0
    %69 = vmatpush.msra.mxu0 0.0
    %70 = vmatpush.msra.mxu0 %v49
    %71 = vmatpush.msra.mxu0 %v48
    %72 = vmatpush.msra.mxu0 %v47
    %73 = vmatpush.msra.mxu0 %v46
    %74 = vmatmul.f32.gmra.mxu0 %v56
    %v75 = vpop.f32.mrf.mxu0
    %v76 = vadd.f32 %v52, %v75
    %77 = vdwg.mxu0
    %v78 = vtanh.pop %v76
    %79 = vst.msk [vmem:[#allocation7] sm:$0xff] %vm54, %v78
    // Predicated region
    $region22: #{tpu_custom_call.1} parent=1 // pred_check
      _
    $region23: #{tpu_custom_call.1} parent=1 // pred_check_branch
      %81 = sbr.rel (0) target = $region25
    $region24: #{tpu_custom_call.1} parent=1 // pred_region
      %83 = vsyncadd [#allocation4], 0
      %s85 = sshll.u32 [#allocation7], 4
      %s86 = int_to_ptr.vmem [resolvable:$true] %s85
      %s87 = sshll.u32 %s3, 4
      %s88 = int_to_ptr.hbm [resolvable:$true] %s87
      %90 = dma.vmem_to_hbm [thread:$0]  %s86, 128, %s88, [#allocation4]
    $region25: #{tpu_custom_call.1} parent=1 // pred_fallthru
      _
    // Predicated region
    $region26: #{tpu_custom_call.1} parent=1 // pred_check
      _
    $region27: #{tpu_custom_call.1} parent=1 // pred_check_branch
      %92 = sbr.rel (0) target = $region29
    $region28: #{tpu_custom_call.1} parent=1 // pred_region
      %94 = dma.done [#allocation4], 128
    $region29: #{tpu_custom_call.1} parent=1 // pred_fallthru
      _
    %95 = vsyncpa [#allocation3], 1
    %96 = vsyncpa [#allocation6], 1
    %97 = vsyncpa [#allocation4], 1

</llo_original>
